<compile_context>
chip_gen: v7x
topology: tpu7x:2x2x1
jax: 0.10.0
libtpu: 0.0.40
codegen_flags: <defaults>
</compile_context>

<pallas_src>
import functools

import numpy as np

import jax
import jax.numpy as jnp
from jax.experimental import pallas as pl
from jax.experimental.pallas import tpu as pltpu


def _fused_adapter_kernel(x_ref, w_ref, mask_ref, gamma_ref, beta_ref, o_ref, *,
                          width, eps, count):
    """conv3x3 (+ folded battery) + BatchNorm for the whole batch in one step.

    x_ref:     (Cin,  N*H*W) f32   channels on sublanes, flattened batch*spatial on lanes
    w_ref:     (9, Cout, Cin) bf16 per-tap conv weights, battery folded into tap 4 (center)
    mask_ref:  (9, N*H*W) f32      0 where a tap would read across an image / row border
    gamma_ref: (Cout, 1) f32
    beta_ref:  (Cout, 1) f32
    o_ref:     (Cout, N*H*W) f32   lane-dense output
    """
    nhw = x_ref.shape[1]
    cout = o_ref.shape[0]

    x = x_ref[...]                                    # single VMEM load, reused by all taps
    acc = jnp.zeros((cout, nhw), jnp.float32)

    tap = 0
    for dh in (-1, 0, 1):
        for dw in (-1, 0, 1):
            shift = (-(dh * width + dw)) % nhw        # static; tap[p] = x[p + dh*W + dw]
            rolled = pltpu.roll(x, shift=shift, axis=1) if shift else x
            partial = jnp.dot(w_ref[tap], rolled.astype(jnp.bfloat16),
                              preferred_element_type=jnp.float32)
            # Border mask is constant over the channel contraction -> apply post-matmul.
            acc = acc + partial * mask_ref[tap:tap + 1, :]
            tap += 1

    # BatchNorm with batch statistics (two-pass: accumulator is resident, so the second
    # pass is cheap VPU/XLU work and avoids E[x^2] - E[x]^2 cancellation).
    inv_count = 1.0 / count
    mean = jnp.sum(acc, axis=1, keepdims=True) * inv_count
    centered = acc - mean
    var = jnp.sum(centered * centered, axis=1, keepdims=True) * inv_count
    inv_std = jax.lax.rsqrt(var + eps)
    o_ref[...] = centered * (gamma_ref[...] * inv_std) + beta_ref[...]


def _tap_masks(n, height, width):
    """(9, N*H*W) masks, one per 3x3 tap: zero where (h+dh, w+dw) leaves the image."""
    hw = height * width
    q = np.arange(n * hw) % hw
    hh, ww = q // width, q % width
    rows = []
    for dh in (-1, 0, 1):
        for dw in (-1, 0, 1):
            rows.append((hh + dh >= 0) & (hh + dh < height) &
                        (ww + dw >= 0) & (ww + dw < width))
    return jnp.asarray(np.stack(rows), dtype=jnp.float32)


@jax.jit
def sparse_latent_adapter(x, w3, w1, alpha, gamma, beta):
    """x: (N, Cin, H, W) f32.  Returns BatchNorm(conv3x3(x) + battery(x)), NCHW f32."""
    eps = 1e-5
    n, cin, height, width = x.shape
    cout = w3.shape[-1]
    nhw = n * height * width

    # Rough working-set check for the fused single-step kernel (x + masks + acc + out, f32).
    vmem_est = 4 * (cin + 2 * cout + 9) * nhw
    assert vmem_est < 24 * 1024 * 1024, "working set too large for the fused kernel; tile"

    # ---- fold SparseBattery (softmax-gated bank of 1x1 convs) into the 3x3 center tap ----
    gates = jax.nn.softmax(alpha.reshape(-1))                       # (K,)
    wb = jnp.einsum("k,kio->oi", gates, w1)                         # (Cout, Cin)
    w_taps = jnp.transpose(w3, (0, 1, 3, 2)).reshape(9, cout, cin)  # (9, Cout, Cin)
    w_taps = w_taps.at[4].add(wb).astype(jnp.bfloat16)              # bf16 MXU operand

    # Layout plumbing: channels on sublanes, flattened batch*spatial on lanes.
    x2 = jnp.transpose(x, (1, 0, 2, 3)).reshape(cin, nhw)
    masks = _tap_masks(n, height, width)

    out = pl.pallas_call(
        functools.partial(_fused_adapter_kernel, width=width, eps=eps, count=float(nhw)),
        out_shape=jax.ShapeDtypeStruct((cout, nhw), jnp.float32),
    )(x2, w_taps, masks, gamma.reshape(cout, 1), beta.reshape(cout, 1))

    return jnp.transpose(out.reshape(cout, n, height, width), (1, 0, 2, 3))


def _reference(x, w3, w1, alpha, gamma, beta, eps=1e-5):
    """Pure-JAX f32 reference (same math, XLA conv), NCHW."""
    dn = jax.lax.conv_dimension_numbers(x.shape, w3.shape, ("NCHW", "HWIO", "NCHW"))
    y = jax.lax.conv_general_dilated(
        x, w3, window_strides=(1, 1), padding=((1, 1), (1, 1)),
        dimension_numbers=dn, precision=jax.lax.Precision.HIGHEST)
    gates = jax.nn.softmax(alpha.reshape(-1))
    wb = jnp.einsum("k,kio->io", gates, w1)
    y = y + jnp.einsum("nihw,io->nohw", x, wb, precision=jax.lax.Precision.HIGHEST)
    mean = y.mean(axis=(0, 2, 3), keepdims=True)
    var = y.var(axis=(0, 2, 3), keepdims=True)
    return (y - mean) * jax.lax.rsqrt(var + eps) * gamma.reshape(1, -1, 1, 1) \
        + beta.reshape(1, -1, 1, 1)


if __name__ == "__main__":
    # Small shapes implied by the module: batch=2, in_planes=4, planes=8,
    # spatial=16x16, stride=1, num_adapters=3.
    N, Cin, Cout, H, W, K = 2, 4, 8, 16, 16, 3

    key = jax.random.PRNGKey(0)
    kx, k3, k1, ka, kg, kb = jax.random.split(key, 6)

    x = jax.random.normal(kx, (N, Cin, H, W), jnp.float32)               # NCHW, like PyTorch
    w3 = jax.random.normal(k3, (3, 3, Cin, Cout), jnp.float32) * (1.0 / (3.0 * Cin ** 0.5))
    w1 = jax.random.normal(k1, (K, Cin, Cout), jnp.float32) * (1.0 / Cin ** 0.5)
    alpha = jax.random.normal(ka, (K,), jnp.float32)
    gamma = 1.0 + 0.1 * jax.random.normal(kg, (Cout,), jnp.float32)      # BN weight
    beta = 0.1 * jax.random.normal(kb, (Cout,), jnp.float32)             # BN bias

    out = jax.block_until_ready(sparse_latent_adapter(x, w3, w1, alpha, gamma, beta))
    ref = jax.block_until_ready(_reference(x, w3, w1, alpha, gamma, beta))

    assert out.shape == (N, Cout, H, W)
    err = float(jnp.max(jnp.abs(out - ref)))
    # bf16 MXU operands -> loosened tolerance vs the f32 HIGHEST-precision reference.
    assert err < 5e-2, f"max abs err {err}"
    print("KERNEL_OK")
</pallas_src>

<mosaic_0001>
module attributes {stable_mosaic.version = 11 : i64} {
  func.func @_fused_adapter_kernel(%arg0: memref<4x512xf32, #tpu.memory_space<vmem>>, %arg1: memref<9x8x4xbf16, #tpu.memory_space<vmem>>, %arg2: memref<9x512xf32, #tpu.memory_space<vmem>>, %arg3: memref<8x1xf32, #tpu.memory_space<vmem>>, %arg4: memref<8x1xf32, #tpu.memory_space<vmem>>, %arg5: memref<8x512xf32, #tpu.memory_space<vmem>>) attributes {dimension_semantics = [], scalar_prefetch = 0 : i64, scratch_operands = 0 : i64, tpu.core_type = #tpu.core_type<tc>} {
    %c0 = arith.constant 0 : index
    %c0_0 = arith.constant 0 : index
    %0 = vector.load %arg0[%c0, %c0_0] : memref<4x512xf32, #tpu.memory_space<vmem>>, vector<4x512xf32>
    %cst = arith.constant 0.000000e+00 : f32
    %1 = vector.broadcast %cst : f32 to vector<8x512xf32>
    %c17_i32 = arith.constant 17 : i32
    %2 = tpu.dynamic_rotate %0 by %c17_i32 dim 1 : vector<4x512xf32>, i32 -> vector<4x512xf32>
    %c0_1 = arith.constant 0 : index
    %c0_2 = arith.constant 0 : index
    %c0_3 = arith.constant 0 : index
    %3 = vector.load %arg1[%c0_1, %c0_2, %c0_3] : memref<9x8x4xbf16, #tpu.memory_space<vmem>>, vector<1x8x4xbf16>
    %4 = vector.shape_cast %3 : vector<1x8x4xbf16> to vector<8x4xbf16>
    %5 = arith.truncf %2 : vector<4x512xf32> to vector<4x512xbf16>
    %cst_4 = arith.constant dense<0.000000e+00> : vector<8x512xf32>
    %6 = tpu.matmul %4, %5, %cst_4 {dimension_numbers = #tpu.dot_dimension_numbers<[1], [0], [0], [1], [0, 0, 1, 1], [], []>} : vector<8x4xbf16>, vector<4x512xbf16>, vector<8x512xf32> -> vector<8x512xf32>
    %c0_5 = arith.constant 0 : index
    %c0_6 = arith.constant 0 : index
    %7 = vector.load %arg2[%c0_5, %c0_6] : memref<9x512xf32, #tpu.memory_space<vmem>>, vector<1x512xf32>
    %8 = vector.broadcast %7 : vector<1x512xf32> to vector<8x512xf32>
    %9 = arith.mulf %6, %8 : vector<8x512xf32>
    %10 = arith.addf %1, %9 : vector<8x512xf32>
    %c16_i32 = arith.constant 16 : i32
    %11 = tpu.dynamic_rotate %0 by %c16_i32 dim 1 : vector<4x512xf32>, i32 -> vector<4x512xf32>
    %c1 = arith.constant 1 : index
    %c0_7 = arith.constant 0 : index
    %c0_8 = arith.constant 0 : index
    %12 = vector.load %arg1[%c1, %c0_7, %c0_8] : memref<9x8x4xbf16, #tpu.memory_space<vmem>>, vector<1x8x4xbf16>
    %13 = vector.shape_cast %12 : vector<1x8x4xbf16> to vector<8x4xbf16>
    %14 = arith.truncf %11 : vector<4x512xf32> to vector<4x512xbf16>
    %cst_9 = arith.constant dense<0.000000e+00> : vector<8x512xf32>
    %15 = tpu.matmul %13, %14, %cst_9 {dimension_numbers = #tpu.dot_dimension_numbers<[1], [0], [0], [1], [0, 0, 1, 1], [], []>} : vector<8x4xbf16>, vector<4x512xbf16>, vector<8x512xf32> -> vector<8x512xf32>
    %c1_10 = arith.constant 1 : index
    %c0_11 = arith.constant 0 : index
    %16 = vector.load %arg2[%c1_10, %c0_11] : memref<9x512xf32, #tpu.memory_space<vmem>>, vector<1x512xf32>
    %17 = vector.broadcast %16 : vector<1x512xf32> to vector<8x512xf32>
    %18 = arith.mulf %15, %17 : vector<8x512xf32>
    %19 = arith.addf %10, %18 : vector<8x512xf32>
    %c15_i32 = arith.constant 15 : i32
    %20 = tpu.dynamic_rotate %0 by %c15_i32 dim 1 : vector<4x512xf32>, i32 -> vector<4x512xf32>
    %c2 = arith.constant 2 : index
    %c0_12 = arith.constant 0 : index
    %c0_13 = arith.constant 0 : index
    %21 = vector.load %arg1[%c2, %c0_12, %c0_13] : memref<9x8x4xbf16, #tpu.memory_space<vmem>>, vector<1x8x4xbf16>
    %22 = vector.shape_cast %21 : vector<1x8x4xbf16> to vector<8x4xbf16>
    %23 = arith.truncf %20 : vector<4x512xf32> to vector<4x512xbf16>
    %cst_14 = arith.constant dense<0.000000e+00> : vector<8x512xf32>
    %24 = tpu.matmul %22, %23, %cst_14 {dimension_numbers = #tpu.dot_dimension_numbers<[1], [0], [0], [1], [0, 0, 1, 1], [], []>} : vector<8x4xbf16>, vector<4x512xbf16>, vector<8x512xf32> -> vector<8x512xf32>
    %c2_15 = arith.constant 2 : index
    %c0_16 = arith.constant 0 : index
    %25 = vector.load %arg2[%c2_15, %c0_16] : memref<9x512xf32, #tpu.memory_space<vmem>>, vector<1x512xf32>
    %26 = vector.broadcast %25 : vector<1x512xf32> to vector<8x512xf32>
    %27 = arith.mulf %24, %26 : vector<8x512xf32>
    %28 = arith.addf %19, %27 : vector<8x512xf32>
    %c1_i32 = arith.constant 1 : i32
    %29 = tpu.dynamic_rotate %0 by %c1_i32 dim 1 : vector<4x512xf32>, i32 -> vector<4x512xf32>
    %c3 = arith.constant 3 : index
    %c0_17 = arith.constant 0 : index
    %c0_18 = arith.constant 0 : index
    %30 = vector.load %arg1[%c3, %c0_17, %c0_18] : memref<9x8x4xbf16, #tpu.memory_space<vmem>>, vector<1x8x4xbf16>
    %31 = vector.shape_cast %30 : vector<1x8x4xbf16> to vector<8x4xbf16>
    %32 = arith.truncf %29 : vector<4x512xf32> to vector<4x512xbf16>
    %cst_19 = arith.constant dense<0.000000e+00> : vector<8x512xf32>
    %33 = tpu.matmul %31, %32, %cst_19 {dimension_numbers = #tpu.dot_dimension_numbers<[1], [0], [0], [1], [0, 0, 1, 1], [], []>} : vector<8x4xbf16>, vector<4x512xbf16>, vector<8x512xf32> -> vector<8x512xf32>
    %c3_20 = arith.constant 3 : index
    %c0_21 = arith.constant 0 : index
    %34 = vector.load %arg2[%c3_20, %c0_21] : memref<9x512xf32, #tpu.memory_space<vmem>>, vector<1x512xf32>
    %35 = vector.broadcast %34 : vector<1x512xf32> to vector<8x512xf32>
    %36 = arith.mulf %33, %35 : vector<8x512xf32>
    %37 = arith.addf %28, %36 : vector<8x512xf32>
    %c4 = arith.constant 4 : index
    %c0_22 = arith.constant 0 : index
    %c0_23 = arith.constant 0 : index
    %38 = vector.load %arg1[%c4, %c0_22, %c0_23] : memref<9x8x4xbf16, #tpu.memory_space<vmem>>, vector<1x8x4xbf16>
    %39 = vector.shape_cast %38 : vector<1x8x4xbf16> to vector<8x4xbf16>
    %40 = arith.truncf %0 : vector<4x512xf32> to vector<4x512xbf16>
    %cst_24 = arith.constant dense<0.000000e+00> : vector<8x512xf32>
    %41 = tpu.matmul %39, %40, %cst_24 {dimension_numbers = #tpu.dot_dimension_numbers<[1], [0], [0], [1], [0, 0, 1, 1], [], []>} : vector<8x4xbf16>, vector<4x512xbf16>, vector<8x512xf32> -> vector<8x512xf32>
    %c4_25 = arith.constant 4 : index
    %c0_26 = arith.constant 0 : index
    %42 = vector.load %arg2[%c4_25, %c0_26] : memref<9x512xf32, #tpu.memory_space<vmem>>, vector<1x512xf32>
    %43 = vector.broadcast %42 : vector<1x512xf32> to vector<8x512xf32>
    %44 = arith.mulf %41, %43 : vector<8x512xf32>
    %45 = arith.addf %37, %44 : vector<8x512xf32>
    %c511_i32 = arith.constant 511 : i32
    %46 = tpu.dynamic_rotate %0 by %c511_i32 dim 1 : vector<4x512xf32>, i32 -> vector<4x512xf32>
    %c5 = arith.constant 5 : index
    %c0_27 = arith.constant 0 : index
    %c0_28 = arith.constant 0 : index
    %47 = vector.load %arg1[%c5, %c0_27, %c0_28] : memref<9x8x4xbf16, #tpu.memory_space<vmem>>, vector<1x8x4xbf16>
    %48 = vector.shape_cast %47 : vector<1x8x4xbf16> to vector<8x4xbf16>
    %49 = arith.truncf %46 : vector<4x512xf32> to vector<4x512xbf16>
    %cst_29 = arith.constant dense<0.000000e+00> : vector<8x512xf32>
    %50 = tpu.matmul %48, %49, %cst_29 {dimension_numbers = #tpu.dot_dimension_numbers<[1], [0], [0], [1], [0, 0, 1, 1], [], []>} : vector<8x4xbf16>, vector<4x512xbf16>, vector<8x512xf32> -> vector<8x512xf32>
    %c5_30 = arith.constant 5 : index
    %c0_31 = arith.constant 0 : index
    %51 = vector.load %arg2[%c5_30, %c0_31] : memref<9x512xf32, #tpu.memory_space<vmem>>, vector<1x512xf32>
    %52 = vector.broadcast %51 : vector<1x512xf32> to vector<8x512xf32>
    %53 = arith.mulf %50, %52 : vector<8x512xf32>
    %54 = arith.addf %45, %53 : vector<8x512xf32>
    %c497_i32 = arith.constant 497 : i32
    %55 = tpu.dynamic_rotate %0 by %c497_i32 dim 1 : vector<4x512xf32>, i32 -> vector<4x512xf32>
    %c6 = arith.constant 6 : index
    %c0_32 = arith.constant 0 : index
    %c0_33 = arith.constant 0 : index
    %56 = vector.load %arg1[%c6, %c0_32, %c0_33] : memref<9x8x4xbf16, #tpu.memory_space<vmem>>, vector<1x8x4xbf16>
    %57 = vector.shape_cast %56 : vector<1x8x4xbf16> to vector<8x4xbf16>
    %58 = arith.truncf %55 : vector<4x512xf32> to vector<4x512xbf16>
    %cst_34 = arith.constant dense<0.000000e+00> : vector<8x512xf32>
    %59 = tpu.matmul %57, %58, %cst_34 {dimension_numbers = #tpu.dot_dimension_numbers<[1], [0], [0], [1], [0, 0, 1, 1], [], []>} : vector<8x4xbf16>, vector<4x512xbf16>, vector<8x512xf32> -> vector<8x512xf32>
    %c6_35 = arith.constant 6 : index
    %c0_36 = arith.constant 0 : index
    %60 = vector.load %arg2[%c6_35, %c0_36] : memref<9x512xf32, #tpu.memory_space<vmem>>, vector<1x512xf32>
    %61 = vector.broadcast %60 : vector<1x512xf32> to vector<8x512xf32>
    %62 = arith.mulf %59, %61 : vector<8x512xf32>
    %63 = arith.addf %54, %62 : vector<8x512xf32>
    %c496_i32 = arith.constant 496 : i32
    %64 = tpu.dynamic_rotate %0 by %c496_i32 dim 1 : vector<4x512xf32>, i32 -> vector<4x512xf32>
    %c7 = arith.constant 7 : index
    %c0_37 = arith.constant 0 : index
    %c0_38 = arith.constant 0 : index
    %65 = vector.load %arg1[%c7, %c0_37, %c0_38] : memref<9x8x4xbf16, #tpu.memory_space<vmem>>, vector<1x8x4xbf16>
    %66 = vector.shape_cast %65 : vector<1x8x4xbf16> to vector<8x4xbf16>
    %67 = arith.truncf %64 : vector<4x512xf32> to vector<4x512xbf16>
    %cst_39 = arith.constant dense<0.000000e+00> : vector<8x512xf32>
    %68 = tpu.matmul %66, %67, %cst_39 {dimension_numbers = #tpu.dot_dimension_numbers<[1], [0], [0], [1], [0, 0, 1, 1], [], []>} : vector<8x4xbf16>, vector<4x512xbf16>, vector<8x512xf32> -> vector<8x512xf32>
    %c7_40 = arith.constant 7 : index
    %c0_41 = arith.constant 0 : index
    %69 = vector.load %arg2[%c7_40, %c0_41] : memref<9x512xf32, #tpu.memory_space<vmem>>, vector<1x512xf32>
    %70 = vector.broadcast %69 : vector<1x512xf32> to vector<8x512xf32>
    %71 = arith.mulf %68, %70 : vector<8x512xf32>
    %72 = arith.addf %63, %71 : vector<8x512xf32>
    %c495_i32 = arith.constant 495 : i32
    %73 = tpu.dynamic_rotate %0 by %c495_i32 dim 1 : vector<4x512xf32>, i32 -> vector<4x512xf32>
    %c8 = arith.constant 8 : index
    %c0_42 = arith.constant 0 : index
    %c0_43 = arith.constant 0 : index
    %74 = vector.load %arg1[%c8, %c0_42, %c0_43] : memref<9x8x4xbf16, #tpu.memory_space<vmem>>, vector<1x8x4xbf16>
    %75 = vector.shape_cast %74 : vector<1x8x4xbf16> to vector<8x4xbf16>
    %76 = arith.truncf %73 : vector<4x512xf32> to vector<4x512xbf16>
    %cst_44 = arith.constant dense<0.000000e+00> : vector<8x512xf32>
    %77 = tpu.matmul %75, %76, %cst_44 {dimension_numbers = #tpu.dot_dimension_numbers<[1], [0], [0], [1], [0, 0, 1, 1], [], []>} : vector<8x4xbf16>, vector<4x512xbf16>, vector<8x512xf32> -> vector<8x512xf32>
    %c8_45 = arith.constant 8 : index
    %c0_46 = arith.constant 0 : index
    %78 = vector.load %arg2[%c8_45, %c0_46] : memref<9x512xf32, #tpu.memory_space<vmem>>, vector<1x512xf32>
    %79 = vector.broadcast %78 : vector<1x512xf32> to vector<8x512xf32>
    %80 = arith.mulf %77, %79 : vector<8x512xf32>
    %81 = arith.addf %72, %80 : vector<8x512xf32>
    %cst_47 = arith.constant dense<0.000000e+00> : vector<8xf32>
    %82 = vector.multi_reduction <add>, %81, %cst_47 [1] : vector<8x512xf32> to vector<8xf32>
    %83 = vector.shape_cast %82 : vector<8xf32> to vector<8x1xf32>
    %cst_48 = arith.constant 0.001953125 : f32
    %84 = vector.broadcast %cst_48 : f32 to vector<8x1xf32>
    %85 = arith.mulf %83, %84 : vector<8x1xf32>
    %86 = vector.broadcast %85 : vector<8x1xf32> to vector<8x512xf32>
    %87 = arith.subf %81, %86 : vector<8x512xf32>
    %88 = arith.mulf %87, %87 : vector<8x512xf32>
    %cst_49 = arith.constant dense<0.000000e+00> : vector<8xf32>
    %89 = vector.multi_reduction <add>, %88, %cst_49 [1] : vector<8x512xf32> to vector<8xf32>
    %90 = vector.shape_cast %89 : vector<8xf32> to vector<8x1xf32>
    %cst_50 = arith.constant 0.001953125 : f32
    %91 = vector.broadcast %cst_50 : f32 to vector<8x1xf32>
    %92 = arith.mulf %90, %91 : vector<8x1xf32>
    %cst_51 = arith.constant 9.99999974E-6 : f32
    %93 = vector.broadcast %cst_51 : f32 to vector<8x1xf32>
    %94 = arith.addf %92, %93 : vector<8x1xf32>
    %95 = math.rsqrt %94 : vector<8x1xf32>
    %c0_52 = arith.constant 0 : index
    %c0_53 = arith.constant 0 : index
    %96 = vector.load %arg3[%c0_52, %c0_53] : memref<8x1xf32, #tpu.memory_space<vmem>>, vector<8x1xf32>
    %97 = arith.mulf %96, %95 : vector<8x1xf32>
    %98 = vector.broadcast %97 : vector<8x1xf32> to vector<8x512xf32>
    %99 = arith.mulf %87, %98 : vector<8x512xf32>
    %c0_54 = arith.constant 0 : index
    %c0_55 = arith.constant 0 : index
    %100 = vector.load %arg4[%c0_54, %c0_55] : memref<8x1xf32, #tpu.memory_space<vmem>>, vector<8x1xf32>
    %101 = vector.broadcast %100 : vector<8x1xf32> to vector<8x512xf32>
    %102 = arith.addf %99, %101 : vector<8x512xf32>
    %c0_56 = arith.constant 0 : index
    %c0_57 = arith.constant 0 : index
    %103 = vector.load %arg5[%c0_56, %c0_57] : memref<8x512xf32, #tpu.memory_space<vmem>>, vector<8x512xf32>
    tpu.vector_store %arg5[%c0_56, %c0_57], %102 {strides = array<i32>} : memref<8x512xf32, #tpu.memory_space<vmem>>, vector<8x512xf32>,
    return
  }
}

</mosaic_0001>

<llo_original>
// kernel: sparse_latent_adapter.1
$region0: #{sparse_latent_adapter.1}
  #allocation0 [shape = 'u32[]', space=smem, size = 0x4, offset = 0x4, fixed_abs, tag = 'smem constant byte address 0x4 - core index']
  #allocation1 [shape = 'u32[144,128]{1,0:T(1,128)}', space=vmem, size = 0x12000, scoped, tag = 'internal scratch']
  %s0 = inlined_call_operand.vmem [shape: f32[4,512], index: 0, kind: input, shape index: {}]
  %s1 = inlined_call_operand.vmem [shape: bf16[9,8,4], index: 1, kind: input, shape index: {}]
  %s2 = inlined_call_operand.vmem [shape: f32[9,512], index: 2, kind: input, shape index: {}]
  %s3 = inlined_call_operand.vmem [shape: f32[8,1], index: 3, kind: input, shape index: {}]
  %s4 = inlined_call_operand.vmem [shape: f32[8,1], index: 4, kind: input, shape index: {}]
  %s5 = inlined_call_operand.vmem [shape: f32[8,512], index: 5, kind: output, shape index: {}]
  %s6 = sld [smem:[#allocation0]]
  $region30: #{sparse_latent_adapter.1} parent=0
    _
  %s8 = ssub.s32 1, %s6
  %s9 = scalar_select 0, %s8, %s6
  // Predicated region
  $region2: #{sparse_latent_adapter.1} parent=0 // pred_check
    _
  $region3: #{sparse_latent_adapter.1} parent=0 // pred_check_branch
    %11 = sbr.rel (0) target = $region5
  $region4: #{sparse_latent_adapter.1} parent=0 // pred_region
    _
  $region5: #{sparse_latent_adapter.1} parent=0 // pred_fallthru
    _
  // Predicated region
  $region6: #{sparse_latent_adapter.1} parent=0 // pred_check
    _
  $region7: #{sparse_latent_adapter.1} parent=0 // pred_check_branch
    %13 = sbr.rel (0) target = $region9
  $region8: #{sparse_latent_adapter.1} parent=0 // pred_region
    _
  $region9: #{sparse_latent_adapter.1} parent=0 // pred_fallthru
    _
  // Predicated region
  $region10: #{sparse_latent_adapter.1} parent=0 // pred_check
    _
  $region11: #{sparse_latent_adapter.1} parent=0 // pred_check_branch
    %15 = sbr.rel (0) target = $region13
  $region12: #{sparse_latent_adapter.1} parent=0 // pred_region
    _
  $region13: #{sparse_latent_adapter.1} parent=0 // pred_fallthru
    _
  // Predicated region
  $region14: #{sparse_latent_adapter.1} parent=0 // pred_check
    _
  $region15: #{sparse_latent_adapter.1} parent=0 // pred_check_branch
    %17 = sbr.rel (0) target = $region17
  $region16: #{sparse_latent_adapter.1} parent=0 // pred_region
    _
  $region17: #{sparse_latent_adapter.1} parent=0 // pred_fallthru
    _
  // Predicated region
  $region18: #{sparse_latent_adapter.1} parent=0 // pred_check
    _
  $region19: #{sparse_latent_adapter.1} parent=0 // pred_check_branch
    %19 = sbr.rel (0) target = $region21
  $region20: #{sparse_latent_adapter.1} parent=0 // pred_region
    _
  $region21: #{sparse_latent_adapter.1} parent=0 // pred_fallthru
    _
  %v21 = vld [vmem:[%s0] sm:$0xff]
  %v22 = vld [vmem:[%s0 + $0x8] sm:$0xff]
  %v25 = vcombine.high %v21, %v21
  %v26 = vcombine.high %v22, %v22
  %29 = vrot.lane.b32.xlu0 %v21, 17
  %v30 = vpop.permute.xlu0 %29
  %31 = vrot.lane.b32.xlu0 %v25, 17
  %v32 = vpop.permute.xlu0 %31
  %33 = vrot.lane.b32.xlu0 %v22, 17
  %v34 = vpop.permute.xlu0 %33
  %35 = vrot.lane.b32.xlu0 %v26, 17
  %v36 = vpop.permute.xlu0 %35
  %v37 = vlaneseq
  %v38 = vand.u32 %v37, 127
  %vm39 = vcmp.lt.s32.totalorder %v38, 17
  %v40 = vsel %vm39, %v34, %v36
  %v41 = vsel %vm39, %v32, %v34
  %v42 = vsel %vm39, %v30, %v32
  %v43 = vsel %vm39, %v36, %v30
  %v44 = vld [vmem:[%s1] sm:$0xf]
  %v45 = vpack.c.bf16 %v43, %v43
  %v46 = vpack.c.bf16 %v42, %v42
  %v47 = vpack.c.bf16 %v41, %v41
  %v48 = vpack.c.bf16 %v40, %v40
  %vm49 = vcmask 31744
  %v51 = vsel %vm49, %v44, 0
  %vm53 = vcmask 1041408
  %v55 = vsel %vm53, %v45, 0
  %v58 = vsel %vm53, %v46, 0
  %v61 = vsel %vm53, %v47, 0
  %v64 = vsel %vm53, %v48, 0
  %66 = vmatprep.subr.bf16.mxu0 %v58
  %67 = vmatpush1.bf16.msra.mxu0 %v55
  %68 = vmatprep.subr.bf16.mxu0 0
  %69 = vmatpush1.bf16.msra.mxu0 0
  %70 = vmatprep.subr.bf16.mxu0 0
  %71 = vmatpush1.bf16.msra.mxu0 0
  %72 = vmatprep.subr.bf16.mxu0 0
  %73 = vmatpush1.bf16.msra.mxu0 0
  %74 = vmatprep.subr.bf16.mxu0 0
  %75 = vmatpush1.bf16.msra.mxu0 0
  %76 = vmatprep.subr.bf16.mxu0 0
  %77 = vmatpush1.bf16.msra.mxu0 0
  %78 = vmatprep.subr.bf16.mxu0 0
  %79 = vmatpush1.bf16.msra.mxu0 0
  %80 = vmatprep.subr.bf16.mxu0 0
  %81 = vmatpush1.bf16.msra.mxu0 0
  %82 = vmatprep.subr.bf16.mxu0 0
  %83 = vmatpush1.bf16.msra.mxu0 0
  %84 = vmatprep.subr.bf16.mxu0 0
  %85 = vmatpush1.bf16.msra.mxu0 0
  %86 = vmatprep.subr.bf16.mxu0 0
  %87 = vmatpush1.bf16.msra.mxu0 0
  %88 = vmatprep.subr.bf16.mxu0 0
  %89 = vmatpush1.bf16.msra.mxu0 0
  %90 = vmatprep.subr.bf16.mxu0 0
  %91 = vmatpush1.bf16.msra.mxu0 0
  %92 = vmatprep.subr.bf16.mxu0 0
  %93 = vmatpush1.bf16.msra.mxu0 0
  %94 = vmatprep.subr.bf16.mxu0 0
  %95 = vmatpush1.bf16.msra.mxu0 0
  %96 = vmatprep.subr.bf16.mxu0 0
  %97 = vmatpush1.bf16.msra.mxu0 0
  %98 = vmatprep.mubr.bf16.mxu0 0
  %99 = vmatmul.mubr.bf16.gmra.mrb[0].mxu0 %v51
  %v100 = vpop.f32.mrb[0].mxu0
  %v101 = vadd.f32 0.0, %v100
  %v102 = vpop.f32.mrb[0].mxu0
  %v103 = vadd.f32 0.0, %v102
  %v104 = vpop.f32.mrb[0].mxu0
  %v105 = vpop.f32.mrb[0].mxu0
  %106 = vdwg.mxu0
  %107 = vmatprep.subr.bf16.mxu0 %v64
  %108 = vmatpush1.bf16.msra.mxu0 %v61
  %109 = vmatprep.subr.bf16.mxu0 0
  %110 = vmatpush1.bf16.msra.mxu0 0
  %111 = vmatprep.subr.bf16.mxu0 0
  %112 = vmatpush1.bf16.msra.mxu0 0
  %113 = vmatprep.subr.bf16.mxu0 0
  %114 = vmatpush1.bf16.msra.mxu0 0
  %115 = vmatprep.subr.bf16.mxu0 0
  %116 = vmatpush1.bf16.msra.mxu0 0
  %117 = vmatprep.subr.bf16.mxu0 0
  %118 = vmatpush1.bf16.msra.mxu0 0
  %119 = vmatprep.subr.bf16.mxu0 0
  %120 = vmatpush1.bf16.msra.mxu0 0
  %121 = vmatprep.subr.bf16.mxu0 0
  %122 = vmatpush1.bf16.msra.mxu0 0
  %123 = vmatprep.subr.bf16.mxu0 0
  %124 = vmatpush1.bf16.msra.mxu0 0
  %125 = vmatprep.subr.bf16.mxu0 0
  %126 = vmatpush1.bf16.msra.mxu0 0
  %127 = vmatprep.subr.bf16.mxu0 0
  %128 = vmatpush1.bf16.msra.mxu0 0
  %129 = vmatprep.subr.bf16.mxu0 0
  %130 = vmatpush1.bf16.msra.mxu0 0
  %131 = vmatprep.subr.bf16.mxu0 0
  %132 = vmatpush1.bf16.msra.mxu0 0
  %133 = vmatprep.subr.bf16.mxu0 0
  %134 = vmatpush1.bf16.msra.mxu0 0
  %135 = vmatprep.subr.bf16.mxu0 0
  %136 = vmatpush1.bf16.msra.mxu0 0
  %137 = vmatprep.subr.bf16.mxu0 0
  %138 = vmatpush1.bf16.msra.mxu0 0
  %139 = vmatprep.mubr.bf16.mxu0 0
  %140 = vmatmul.mubr.bf16.gmra.mrb[0].mxu0 %v51
  %v141 = vpop.f32.mrb[0].mxu0
  %v142 = vadd.f32 0.0, %v141
  %v143 = vpop.f32.mrb[0].mxu0
  %v144 = vadd.f32 0.0, %v143
  %v145 = vpop.f32.mrb[0].mxu0
  %v146 = vpop.f32.mrb[0].mxu0
  %147 = vdwg.mxu0
  %v148 = vld [vmem:[%s2] ss:$8 sm:$0xf]
  %v150 = vlaneseq
  %v151 = vshrl.u32 %v150, 7
  %v152 = vsub.s32 0, %v151
  %v153 = vrot.slane %v148, %v152
  %v154 = vlaneseq
  %v155 = vshrl.u32 %v154, 7
  %v156 = vsub.s32 1, %v155
  %v157 = vrot.slane %v148, %v156
  %v158 = vlaneseq
  %v159 = vshrl.u32 %v158, 7
  %v160 = vsub.s32 2, %v159
  %v161 = vrot.slane %v148, %v160
  %v162 = vlaneseq
  %v163 = vshrl.u32 %v162, 7
  %v164 = vsub.s32 3, %v163
  %v165 = vrot.slane %v148, %v164
  %v170 = vmul.f32 %v101, %v153
  %v171 = vmul.f32 %v103, %v157
  %v172 = vmul.f32 %v142, %v161
  %v173 = vmul.f32 %v144, %v165
  %v174 = vadd.f32 %v170, 0.0
  %v175 = vadd.f32 %v171, 0.0
  %v176 = vadd.f32 %v172, 0.0
  %v177 = vadd.f32 %v173, 0.0
  %178 = vrot.lane.b32.xlu0 %v21, 16
  %v179 = vpop.permute.xlu0 %178
  %180 = vrot.lane.b32.xlu0 %v25, 16
  %v181 = vpop.permute.xlu0 %180
  %182 = vrot.lane.b32.xlu0 %v22, 16
  %v183 = vpop.permute.xlu0 %182
  %184 = vrot.lane.b32.xlu0 %v26, 16
  %v185 = vpop.permute.xlu0 %184
  %vm186 = vcmp.lt.s32.totalorder %v38, 16
  %v187 = vsel %vm186, %v183, %v185
  %v188 = vsel %vm186, %v181, %v183
  %v189 = vsel %vm186, %v179, %v181
  %v190 = vsel %vm186, %v185, %v179
  %s191 = scalar_lea.vmem %s1, 4
  %v192 = vld [vmem:[%s191] sm:$0xf]
  %v193 = vpack.c.bf16 %v190, %v190
  %v194 = vpack.c.bf16 %v189, %v189
  %v195 = vpack.c.bf16 %v188, %v188
  %v196 = vpack.c.bf16 %v187, %v187
  %v198 = vsel %vm49, %v192, 0
  %v201 = vsel %vm53, %v193, 0
  %v204 = vsel %vm53, %v194, 0
  %v207 = vsel %vm53, %v195, 0
  %v210 = vsel %vm53, %v196, 0
  %212 = vmatprep.subr.bf16.mxu0 %v204
  %213 = vmatpush1.bf16.msra.mxu0 %v201
  %214 = vmatprep.subr.bf16.mxu0 0
  %215 = vmatpush1.bf16.msra.mxu0 0
  %216 = vmatprep.subr.bf16.mxu0 0
  %217 = vmatpush1.bf16.msra.mxu0 0
  %218 = vmatprep.subr.bf16.mxu0 0
  %219 = vmatpush1.bf16.msra.mxu0 0
  %220 = vmatprep.subr.bf16.mxu0 0
  %221 = vmatpush1.bf16.msra.mxu0 0
  %222 = vmatprep.subr.bf16.mxu0 0
  %223 = vmatpush1.bf16.msra.mxu0 0
  %224 = vmatprep.subr.bf16.mxu0 0
  %225 = vmatpush1.bf16.msra.mxu0 0
  %226 = vmatprep.subr.bf16.mxu0 0
  %227 = vmatpush1.bf16.msra.mxu0 0
  %228 = vmatprep.subr.bf16.mxu0 0
  %229 = vmatpush1.bf16.msra.mxu0 0
  %230 = vmatprep.subr.bf16.mxu0 0
  %231 = vmatpush1.bf16.msra.mxu0 0
  %232 = vmatprep.subr.bf16.mxu0 0
  %233 = vmatpush1.bf16.msra.mxu0 0
  %234 = vmatprep.subr.bf16.mxu0 0
  %235 = vmatpush1.bf16.msra.mxu0 0
  %236 = vmatprep.subr.bf16.mxu0 0
  %237 = vmatpush1.bf16.msra.mxu0 0
  %238 = vmatprep.subr.bf16.mxu0 0
  %239 = vmatpush1.bf16.msra.mxu0 0
  %240 = vmatprep.subr.bf16.mxu0 0
  %241 = vmatpush1.bf16.msra.mxu0 0
  %242 = vmatprep.subr.bf16.mxu0 0
  %243 = vmatpush1.bf16.msra.mxu0 0
  %244 = vmatprep.mubr.bf16.mxu0 0
  %245 = vmatmul.mubr.bf16.gmra.mrb[0].mxu0 %v198
  %v246 = vpop.f32.mrb[0].mxu0
  %v247 = vadd.f32 0.0, %v246
  %v248 = vpop.f32.mrb[0].mxu0
  %v249 = vadd.f32 0.0, %v248
  %v250 = vpop.f32.mrb[0].mxu0
  %v251 = vpop.f32.mrb[0].mxu0
  %252 = vdwg.mxu0
  %253 = vmatprep.subr.bf16.mxu0 %v210
  %254 = vmatpush1.bf16.msra.mxu0 %v207
  %255 = vmatprep.subr.bf16.mxu0 0
  %256 = vmatpush1.bf16.msra.mxu0 0
  %257 = vmatprep.subr.bf16.mxu0 0
  %258 = vmatpush1.bf16.msra.mxu0 0
  %259 = vmatprep.subr.bf16.mxu0 0
  %260 = vmatpush1.bf16.msra.mxu0 0
  %261 = vmatprep.subr.bf16.mxu0 0
  %262 = vmatpush1.bf16.msra.mxu0 0
  %263 = vmatprep.subr.bf16.mxu0 0
  %264 = vmatpush1.bf16.msra.mxu0 0
  %265 = vmatprep.subr.bf16.mxu0 0
  %266 = vmatpush1.bf16.msra.mxu0 0
  %267 = vmatprep.subr.bf16.mxu0 0
  %268 = vmatpush1.bf16.msra.mxu0 0
  %269 = vmatprep.subr.bf16.mxu0 0
  %270 = vmatpush1.bf16.msra.mxu0 0
  %271 = vmatprep.subr.bf16.mxu0 0
  %272 = vmatpush1.bf16.msra.mxu0 0
  %273 = vmatprep.subr.bf16.mxu0 0
  %274 = vmatpush1.bf16.msra.mxu0 0
  %275 = vmatprep.subr.bf16.mxu0 0
  %276 = vmatpush1.bf16.msra.mxu0 0
  %277 = vmatprep.subr.bf16.mxu0 0
  %278 = vmatpush1.bf16.msra.mxu0 0
  %279 = vmatprep.subr.bf16.mxu0 0
  %280 = vmatpush1.bf16.msra.mxu0 0
  %281 = vmatprep.subr.bf16.mxu0 0
  %282 = vmatpush1.bf16.msra.mxu0 0
  %283 = vmatprep.subr.bf16.mxu0 0
  %284 = vmatpush1.bf16.msra.mxu0 0
  %285 = vmatprep.mubr.bf16.mxu0 0
  %286 = vmatmul.mubr.bf16.gmra.mrb[0].mxu0 %v198
  %v287 = vpop.f32.mrb[0].mxu0
  %v288 = vadd.f32 0.0, %v287
  %v289 = vpop.f32.mrb[0].mxu0
  %v290 = vadd.f32 0.0, %v289
  %v291 = vpop.f32.mrb[0].mxu0
  %v292 = vpop.f32.mrb[0].mxu0
  %293 = vdwg.mxu0
  %s294 = scalar_lea.vmem %s2, 1
  %v295 = vld [vmem:[%s294] ss:$8 sm:$0xf]
  %v297 = vlaneseq
  %v298 = vshrl.u32 %v297, 7
  %v299 = vsub.s32 0, %v298
  %v300 = vrot.slane %v295, %v299
  %v301 = vlaneseq
  %v302 = vshrl.u32 %v301, 7
  %v303 = vsub.s32 1, %v302
  %v304 = vrot.slane %v295, %v303
  %v305 = vlaneseq
  %v306 = vshrl.u32 %v305, 7
  %v307 = vsub.s32 2, %v306
  %v308 = vrot.slane %v295, %v307
  %v309 = vlaneseq
  %v310 = vshrl.u32 %v309, 7
  %v311 = vsub.s32 3, %v310
  %v312 = vrot.slane %v295, %v311
  %v317 = vmul.f32 %v247, %v300
  %v318 = vmul.f32 %v249, %v304
  %v319 = vmul.f32 %v288, %v308
  %v320 = vmul.f32 %v290, %v312
  %v321 = vadd.f32 %v174, %v317
  %v322 = vadd.f32 %v175, %v318
  %v323 = vadd.f32 %v176, %v319
  %v324 = vadd.f32 %v177, %v320
  %325 = vrot.lane.b32.xlu0 %v21, 15
  %v326 = vpop.permute.xlu0 %325
  %327 = vrot.lane.b32.xlu0 %v25, 15
  %v328 = vpop.permute.xlu0 %327
  %329 = vrot.lane.b32.xlu0 %v22, 15
  %v330 = vpop.permute.xlu0 %329
  %331 = vrot.lane.b32.xlu0 %v26, 15
  %v332 = vpop.permute.xlu0 %331
  %vm333 = vcmp.lt.s32.totalorder %v38, 15
  %v334 = vsel %vm333, %v330, %v332
  %v335 = vsel %vm333, %v328, %v330
  %v336 = vsel %vm333, %v326, %v328
  %v337 = vsel %vm333, %v332, %v326
  %s338 = scalar_lea.vmem %s1, 8
  %v339 = vld [vmem:[%s338] sm:$0xf]
  %v340 = vpack.c.bf16 %v337, %v337
  %v341 = vpack.c.bf16 %v336, %v336
  %v342 = vpack.c.bf16 %v335, %v335
  %v343 = vpack.c.bf16 %v334, %v334
  %v345 = vsel %vm49, %v339, 0
  %v348 = vsel %vm53, %v340, 0
  %v351 = vsel %vm53, %v341, 0
  %v354 = vsel %vm53, %v342, 0
  %v357 = vsel %vm53, %v343, 0
  %359 = vmatprep.subr.bf16.mxu0 %v351
  %360 = vmatpush1.bf16.msra.mxu0 %v348
  %361 = vmatprep.subr.bf16.mxu0 0
  %362 = vmatpush1.bf16.msra.mxu0 0
  %363 = vmatprep.subr.bf16.mxu0 0
  %364 = vmatpush1.bf16.msra.mxu0 0
  %365 = vmatprep.subr.bf16.mxu0 0
  %366 = vmatpush1.bf16.msra.mxu0 0
  %367 = vmatprep.subr.bf16.mxu0 0
  %368 = vmatpush1.bf16.msra.mxu0 0
  %369 = vmatprep.subr.bf16.mxu0 0
  %370 = vmatpush1.bf16.msra.mxu0 0
  %371 = vmatprep.subr.bf16.mxu0 0
  %372 = vmatpush1.bf16.msra.mxu0 0
  %373 = vmatprep.subr.bf16.mxu0 0
  %374 = vmatpush1.bf16.msra.mxu0 0
  %375 = vmatprep.subr.bf16.mxu0 0
  %376 = vmatpush1.bf16.msra.mxu0 0
  %377 = vmatprep.subr.bf16.mxu0 0
  %378 = vmatpush1.bf16.msra.mxu0 0
  %379 = vmatprep.subr.bf16.mxu0 0
  %380 = vmatpush1.bf16.msra.mxu0 0
  %381 = vmatprep.subr.bf16.mxu0 0
  %382 = vmatpush1.bf16.msra.mxu0 0
  %383 = vmatprep.subr.bf16.mxu0 0
  %384 = vmatpush1.bf16.msra.mxu0 0
  %385 = vmatprep.subr.bf16.mxu0 0
  %386 = vmatpush1.bf16.msra.mxu0 0
  %387 = vmatprep.subr.bf16.mxu0 0
  %388 = vmatpush1.bf16.msra.mxu0 0
  %389 = vmatprep.subr.bf16.mxu0 0
  %390 = vmatpush1.bf16.msra.mxu0 0
  %391 = vmatprep.mubr.bf16.mxu0 0
  %392 = vmatmul.mubr.bf16.gmra.mrb[0].mxu0 %v345
  %v393 = vpop.f32.mrb[0].mxu0
  %v394 = vadd.f32 0.0, %v393
  %v395 = vpop.f32.mrb[0].mxu0
  %v396 = vadd.f32 0.0, %v395
  %v397 = vpop.f32.mrb[0].mxu0
  %v398 = vpop.f32.mrb[0].mxu0
  %399 = vdwg.mxu0
  %400 = vmatprep.subr.bf16.mxu0 %v357
  %401 = vmatpush1.bf16.msra.mxu0 %v354
  %402 = vmatprep.subr.bf16.mxu0 0
  %403 = vmatpush1.bf16.msra.mxu0 0
  %404 = vmatprep.subr.bf16.mxu0 0
  %405 = vmatpush1.bf16.msra.mxu0 0
  %406 = vmatprep.subr.bf16.mxu0 0
  %407 = vmatpush1.bf16.msra.mxu0 0
  %408 = vmatprep.subr.bf16.mxu0 0
  %409 = vmatpush1.bf16.msra.mxu0 0
  %410 = vmatprep.subr.bf16.mxu0 0
  %411 = vmatpush1.bf16.msra.mxu0 0
  %412 = vmatprep.subr.bf16.mxu0 0
  %413 = vmatpush1.bf16.msra.mxu0 0
  %414 = vmatprep.subr.bf16.mxu0 0
  %415 = vmatpush1.bf16.msra.mxu0 0
  %416 = vmatprep.subr.bf16.mxu0 0
  %417 = vmatpush1.bf16.msra.mxu0 0
  %418 = vmatprep.subr.bf16.mxu0 0
  %419 = vmatpush1.bf16.msra.mxu0 0
  %420 = vmatprep.subr.bf16.mxu0 0
  %421 = vmatpush1.bf16.msra.mxu0 0
  %422 = vmatprep.subr.bf16.mxu0 0
  %423 = vmatpush1.bf16.msra.mxu0 0
  %424 = vmatprep.subr.bf16.mxu0 0
  %425 = vmatpush1.bf16.msra.mxu0 0
  %426 = vmatprep.subr.bf16.mxu0 0
  %427 = vmatpush1.bf16.msra.mxu0 0
  %428 = vmatprep.subr.bf16.mxu0 0
  %429 = vmatpush1.bf16.msra.mxu0 0
  %430 = vmatprep.subr.bf16.mxu0 0
  %431 = vmatpush1.bf16.msra.mxu0 0
  %432 = vmatprep.mubr.bf16.mxu0 0
  %433 = vmatmul.mubr.bf16.gmra.mrb[0].mxu0 %v345
  %v434 = vpop.f32.mrb[0].mxu0
  %v435 = vadd.f32 0.0, %v434
  %v436 = vpop.f32.mrb[0].mxu0
  %v437 = vadd.f32 0.0, %v436
  %v438 = vpop.f32.mrb[0].mxu0
  %v439 = vpop.f32.mrb[0].mxu0
  %440 = vdwg.mxu0
  %s441 = scalar_lea.vmem %s2, 2
  %v442 = vld [vmem:[%s441] ss:$8 sm:$0xf]
  %v444 = vlaneseq
  %v445 = vshrl.u32 %v444, 7
  %v446 = vsub.s32 0, %v445
  %v447 = vrot.slane %v442, %v446
  %v448 = vlaneseq
  %v449 = vshrl.u32 %v448, 7
  %v450 = vsub.s32 1, %v449
  %v451 = vrot.slane %v442, %v450
  %v452 = vlaneseq
  %v453 = vshrl.u32 %v452, 7
  %v454 = vsub.s32 2, %v453
  %v455 = vrot.slane %v442, %v454
  %v456 = vlaneseq
  %v457 = vshrl.u32 %v456, 7
  %v458 = vsub.s32 3, %v457
  %v459 = vrot.slane %v442, %v458
  %v464 = vmul.f32 %v394, %v447
  %v465 = vmul.f32 %v396, %v451
  %v466 = vmul.f32 %v435, %v455
  %v467 = vmul.f32 %v437, %v459
  %v468 = vadd.f32 %v321, %v464
  %v469 = vadd.f32 %v322, %v465
  %v470 = vadd.f32 %v323, %v466
  %v471 = vadd.f32 %v324, %v467
  %472 = vrot.lane.b32.xlu0 %v21, 1
  %v473 = vpop.permute.xlu0 %472
  %474 = vrot.lane.b32.xlu0 %v25, 1
  %v475 = vpop.permute.xlu0 %474
  %476 = vrot.lane.b32.xlu0 %v22, 1
  %v477 = vpop.permute.xlu0 %476
  %478 = vrot.lane.b32.xlu0 %v26, 1
  %v479 = vpop.permute.xlu0 %478
  %vm480 = vcmp.lt.s32.totalorder %v38, 1
  %v481 = vsel %vm480, %v477, %v479
  %v482 = vsel %vm480, %v475, %v477
  %v483 = vsel %vm480, %v473, %v475
  %v484 = vsel %vm480, %v479, %v473
  %s485 = scalar_lea.vmem %s1, 12
  %v486 = vld [vmem:[%s485] sm:$0xf]
  %v487 = vpack.c.bf16 %v484, %v484
  %v488 = vpack.c.bf16 %v483, %v483
  %v489 = vpack.c.bf16 %v482, %v482
  %v490 = vpack.c.bf16 %v481, %v481
  %v492 = vsel %vm49, %v486, 0
  %v495 = vsel %vm53, %v487, 0
  %v498 = vsel %vm53, %v488, 0
  %v501 = vsel %vm53, %v489, 0
  %v504 = vsel %vm53, %v490, 0
  %506 = vmatprep.subr.bf16.mxu0 %v498
  %507 = vmatpush1.bf16.msra.mxu0 %v495
  %508 = vmatprep.subr.bf16.mxu0 0
  %509 = vmatpush1.bf16.msra.mxu0 0
  %510 = vmatprep.subr.bf16.mxu0 0
  %511 = vmatpush1.bf16.msra.mxu0 0
  %512 = vmatprep.subr.bf16.mxu0 0
  %513 = vmatpush1.bf16.msra.mxu0 0
  %514 = vmatprep.subr.bf16.mxu0 0
  %515 = vmatpush1.bf16.msra.mxu0 0
  %516 = vmatprep.subr.bf16.mxu0 0
  %517 = vmatpush1.bf16.msra.mxu0 0
  %518 = vmatprep.subr.bf16.mxu0 0
  %519 = vmatpush1.bf16.msra.mxu0 0
  %520 = vmatprep.subr.bf16.mxu0 0
  %521 = vmatpush1.bf16.msra.mxu0 0
  %522 = vmatprep.subr.bf16.mxu0 0
  %523 = vmatpush1.bf16.msra.mxu0 0
  %524 = vmatprep.subr.bf16.mxu0 0
  %525 = vmatpush1.bf16.msra.mxu0 0
  %526 = vmatprep.subr.bf16.mxu0 0
  %527 = vmatpush1.bf16.msra.mxu0 0
  %528 = vmatprep.subr.bf16.mxu0 0
  %529 = vmatpush1.bf16.msra.mxu0 0
  %530 = vmatprep.subr.bf16.mxu0 0
  %531 = vmatpush1.bf16.msra.mxu0 0
  %532 = vmatprep.subr.bf16.mxu0 0
  %533 = vmatpush1.bf16.msra.mxu0 0
  %534 = vmatprep.subr.bf16.mxu0 0
  %535 = vmatpush1.bf16.msra.mxu0 0
  %536 = vmatprep.subr.bf16.mxu0 0
  %537 = vmatpush1.bf16.msra.mxu0 0
  %538 = vmatprep.mubr.bf16.mxu0 0
  %539 = vmatmul.mubr.bf16.gmra.mrb[0].mxu0 %v492
  %v540 = vpop.f32.mrb[0].mxu0
  %v541 = vadd.f32 0.0, %v540
  %v542 = vpop.f32.mrb[0].mxu0
  %v543 = vadd.f32 0.0, %v542
  %v544 = vpop.f32.mrb[0].mxu0
  %v545 = vpop.f32.mrb[0].mxu0
  %546 = vdwg.mxu0
  %547 = vmatprep.subr.bf16.mxu0 %v504
  %548 = vmatpush1.bf16.msra.mxu0 %v501
  %549 = vmatprep.subr.bf16.mxu0 0
  %550 = vmatpush1.bf16.msra.mxu0 0
  %551 = vmatprep.subr.bf16.mxu0 0
  %552 = vmatpush1.bf16.msra.mxu0 0
  %553 = vmatprep.subr.bf16.mxu0 0
  %554 = vmatpush1.bf16.msra.mxu0 0
  %555 = vmatprep.subr.bf16.mxu0 0
  %556 = vmatpush1.bf16.msra.mxu0 0
  %557 = vmatprep.subr.bf16.mxu0 0
  %558 = vmatpush1.bf16.msra.mxu0 0
  %559 = vmatprep.subr.bf16.mxu0 0
  %560 = vmatpush1.bf16.msra.mxu0 0
  %561 = vmatprep.subr.bf16.mxu0 0
  %562 = vmatpush1.bf16.msra.mxu0 0
  %563 = vmatprep.subr.bf16.mxu0 0
  %564 = vmatpush1.bf16.msra.mxu0 0
  %565 = vmatprep.subr.bf16.mxu0 0
  %566 = vmatpush1.bf16.msra.mxu0 0
  %567 = vmatprep.subr.bf16.mxu0 0
  %568 = vmatpush1.bf16.msra.mxu0 0
  %569 = vmatprep.subr.bf16.mxu0 0
  %570 = vmatpush1.bf16.msra.mxu0 0
  %571 = vmatprep.subr.bf16.mxu0 0
  %572 = vmatpush1.bf16.msra.mxu0 0
  %573 = vmatprep.subr.bf16.mxu0 0
  %574 = vmatpush1.bf16.msra.mxu0 0
  %575 = vmatprep.subr.bf16.mxu0 0
  %576 = vmatpush1.bf16.msra.mxu0 0
  %577 = vmatprep.subr.bf16.mxu0 0
  %578 = vmatpush1.bf16.msra.mxu0 0
  %579 = vmatprep.mubr.bf16.mxu0 0
  %580 = vmatmul.mubr.bf16.gmra.mrb[0].mxu0 %v492
  %v581 = vpop.f32.mrb[0].mxu0
  %v582 = vadd.f32 0.0, %v581
  %v583 = vpop.f32.mrb[0].mxu0
  %v584 = vadd.f32 0.0, %v583
  %v585 = vpop.f32.mrb[0].mxu0
  %v586 = vpop.f32.mrb[0].mxu0
  %587 = vdwg.mxu0
  %s588 = scalar_lea.vmem %s2, 3
  %v589 = vld [vmem:[%s588] ss:$8 sm:$0xf]
  %v591 = vlaneseq
  %v592 = vshrl.u32 %v591, 7
  %v593 = vsub.s32 0, %v592
  %v594 = vrot.slane %v589, %v593
  %v595 = vlaneseq
  %v596 = vshrl.u32 %v595, 7
  %v597 = vsub.s32 1, %v596
  %v598 = vrot.slane %v589, %v597
  %v599 = vlaneseq
  %v600 = vshrl.u32 %v599, 7
  %v601 = vsub.s32 2, %v600
  %v602 = vrot.slane %v589, %v601
  %v603 = vlaneseq
  %v604 = vshrl.u32 %v603, 7
  %v605 = vsub.s32 3, %v604
  %v606 = vrot.slane %v589, %v605
  %v611 = vmul.f32 %v541, %v594
  %v612 = vmul.f32 %v543, %v598
  %v613 = vmul.f32 %v582, %v602
  %v614 = vmul.f32 %v584, %v606
  %v615 = vadd.f32 %v468, %v611
  %v616 = vadd.f32 %v469, %v612
  %v617 = vadd.f32 %v470, %v613
  %v618 = vadd.f32 %v471, %v614
  %s619 = scalar_lea.vmem %s1, 16
  %v620 = vld [vmem:[%s619] sm:$0xf]
  %v621 = vpack.c.bf16 %v21, %v21
  %v622 = vpack.c.bf16 %v25, %v25
  %v623 = vpack.c.bf16 %v22, %v22
  %v624 = vpack.c.bf16 %v26, %v26
  %v626 = vsel %vm49, %v620, 0
  %v629 = vsel %vm53, %v621, 0
  %v632 = vsel %vm53, %v622, 0
  %v635 = vsel %vm53, %v623, 0
  %v638 = vsel %vm53, %v624, 0
  %640 = vmatprep.subr.bf16.mxu0 %v632
  %641 = vmatpush1.bf16.msra.mxu0 %v629
  %642 = vmatprep.subr.bf16.mxu0 0
  %643 = vmatpush1.bf16.msra.mxu0 0
  %644 = vmatprep.subr.bf16.mxu0 0
  %645 = vmatpush1.bf16.msra.mxu0 0
  %646 = vmatprep.subr.bf16.mxu0 0
  %647 = vmatpush1.bf16.msra.mxu0 0
  %648 = vmatprep.subr.bf16.mxu0 0
  %649 = vmatpush1.bf16.msra.mxu0 0
  %650 = vmatprep.subr.bf16.mxu0 0
  %651 = vmatpush1.bf16.msra.mxu0 0
  %652 = vmatprep.subr.bf16.mxu0 0
  %653 = vmatpush1.bf16.msra.mxu0 0
  %654 = vmatprep.subr.bf16.mxu0 0
  %655 = vmatpush1.bf16.msra.mxu0 0
  %656 = vmatprep.subr.bf16.mxu0 0
  %657 = vmatpush1.bf16.msra.mxu0 0
  %658 = vmatprep.subr.bf16.mxu0 0
  %659 = vmatpush1.bf16.msra.mxu0 0
  %660 = vmatprep.subr.bf16.mxu0 0
  %661 = vmatpush1.bf16.msra.mxu0 0
  %662 = vmatprep.subr.bf16.mxu0 0
  %663 = vmatpush1.bf16.msra.mxu0 0
  %664 = vmatprep.subr.bf16.mxu0 0
  %665 = vmatpush1.bf16.msra.mxu0 0
  %666 = vmatprep.subr.bf16.mxu0 0
  %667 = vmatpush1.bf16.msra.mxu0 0
  %668 = vmatprep.subr.bf16.mxu0 0
  %669 = vmatpush1.bf16.msra.mxu0 0
  %670 = vmatprep.subr.bf16.mxu0 0
  %671 = vmatpush1.bf16.msra.mxu0 0
  %672 = vmatprep.mubr.bf16.mxu0 0
  %673 = vmatmul.mubr.bf16.gmra.mrb[0].mxu0 %v626
  %v674 = vpop.f32.mrb[0].mxu0
  %v675 = vadd.f32 0.0, %v674
  %v676 = vpop.f32.mrb[0].mxu0
  %v677 = vadd.f32 0.0, %v676
  %v678 = vpop.f32.mrb[0].mxu0
  %v679 = vpop.f32.mrb[0].mxu0
  %680 = vdwg.mxu0
  %681 = vmatprep.subr.bf16.mxu0 %v638
  %682 = vmatpush1.bf16.msra.mxu0 %v635
  %683 = vmatprep.subr.bf16.mxu0 0
  %684 = vmatpush1.bf16.msra.mxu0 0
  %685 = vmatprep.subr.bf16.mxu0 0
  %686 = vmatpush1.bf16.msra.mxu0 0
  %687 = vmatprep.subr.bf16.mxu0 0
  %688 = vmatpush1.bf16.msra.mxu0 0
  %689 = vmatprep.subr.bf16.mxu0 0
  %690 = vmatpush1.bf16.msra.mxu0 0
  %691 = vmatprep.subr.bf16.mxu0 0
  %692 = vmatpush1.bf16.msra.mxu0 0
  %693 = vmatprep.subr.bf16.mxu0 0
  %694 = vmatpush1.bf16.msra.mxu0 0
  %695 = vmatprep.subr.bf16.mxu0 0
  %696 = vmatpush1.bf16.msra.mxu0 0
  %697 = vmatprep.subr.bf16.mxu0 0
  %698 = vmatpush1.bf16.msra.mxu0 0
  %699 = vmatprep.subr.bf16.mxu0 0
  %700 = vmatpush1.bf16.msra.mxu0 0
  %701 = vmatprep.subr.bf16.mxu0 0
  %702 = vmatpush1.bf16.msra.mxu0 0
  %703 = vmatprep.subr.bf16.mxu0 0
  %704 = vmatpush1.bf16.msra.mxu0 0
  %705 = vmatprep.subr.bf16.mxu0 0
  %706 = vmatpush1.bf16.msra.mxu0 0
  %707 = vmatprep.subr.bf16.mxu0 0
  %708 = vmatpush1.bf16.msra.mxu0 0
  %709 = vmatprep.subr.bf16.mxu0 0
  %710 = vmatpush1.bf16.msra.mxu0 0
  %711 = vmatprep.subr.bf16.mxu0 0
  %712 = vmatpush1.bf16.msra.mxu0 0
  %713 = vmatprep.mubr.bf16.mxu0 0
  %714 = vmatmul.mubr.bf16.gmra.mrb[0].mxu0 %v626
  %v715 = vpop.f32.mrb[0].mxu0
  %v716 = vadd.f32 0.0, %v715
  %v717 = vpop.f32.mrb[0].mxu0
  %v718 = vadd.f32 0.0, %v717
  %v719 = vpop.f32.mrb[0].mxu0
  %v720 = vpop.f32.mrb[0].mxu0
  %721 = vdwg.mxu0
  %s722 = scalar_lea.vmem %s2, 4
  %v723 = vld [vmem:[%s722] ss:$8 sm:$0xf]
  %v725 = vlaneseq
  %v726 = vshrl.u32 %v725, 7
  %v727 = vsub.s32 0, %v726
  %v728 = vrot.slane %v723, %v727
  %v729 = vlaneseq
  %v730 = vshrl.u32 %v729, 7
  %v731 = vsub.s32 1, %v730
  %v732 = vrot.slane %v723, %v731
  %v733 = vlaneseq
  %v734 = vshrl.u32 %v733, 7
  %v735 = vsub.s32 2, %v734
  %v736 = vrot.slane %v723, %v735
  %v737 = vlaneseq
  %v738 = vshrl.u32 %v737, 7
  %v739 = vsub.s32 3, %v738
  %v740 = vrot.slane %v723, %v739
  %v745 = vmul.f32 %v675, %v728
  %v746 = vmul.f32 %v677, %v732
  %v747 = vmul.f32 %v716, %v736
  %v748 = vmul.f32 %v718, %v740
  %v749 = vadd.f32 %v615, %v745
  %v750 = vadd.f32 %v616, %v746
  %v751 = vadd.f32 %v617, %v747
  %v752 = vadd.f32 %v618, %v748
  %753 = vrot.lane.b32.xlu0 %v21, 127
  %v754 = vpop.permute.xlu0 %753
  %755 = vrot.lane.b32.xlu0 %v25, 127
  %v756 = vpop.permute.xlu0 %755
  %757 = vrot.lane.b32.xlu0 %v22, 127
  %v758 = vpop.permute.xlu0 %757
  %759 = vrot.lane.b32.xlu0 %v26, 127
  %v760 = vpop.permute.xlu0 %759
  %vm761 = vcmp.lt.s32.totalorder %v38, 127
  %v762 = vsel %vm761, %v758, %v760
  %v763 = vsel %vm761, %v756, %v758
  %v764 = vsel %vm761, %v754, %v756
  %v765 = vsel %vm761, %v760, %v754
  %s766 = scalar_lea.vmem %s1, 20
  %v767 = vld [vmem:[%s766] sm:$0xf]
  %v768 = vpack.c.bf16 %v764, %v764
  %v769 = vpack.c.bf16 %v763, %v763
  %v770 = vpack.c.bf16 %v762, %v762
  %v771 = vpack.c.bf16 %v765, %v765
  %v773 = vsel %vm49, %v767, 0
  %v776 = vsel %vm53, %v768, 0
  %v779 = vsel %vm53, %v769, 0
  %v782 = vsel %vm53, %v770, 0
  %v785 = vsel %vm53, %v771, 0
  %787 = vmatprep.subr.bf16.mxu0 %v779
  %788 = vmatpush1.bf16.msra.mxu0 %v776
  %789 = vmatprep.subr.bf16.mxu0 0
  %790 = vmatpush1.bf16.msra.mxu0 0
  %791 = vmatprep.subr.bf16.mxu0 0
  %792 = vmatpush1.bf16.msra.mxu0 0
  %793 = vmatprep.subr.bf16.mxu0 0
  %794 = vmatpush1.bf16.msra.mxu0 0
  %795 = vmatprep.subr.bf16.mxu0 0
  %796 = vmatpush1.bf16.msra.mxu0 0
  %797 = vmatprep.subr.bf16.mxu0 0
  %798 = vmatpush1.bf16.msra.mxu0 0
  %799 = vmatprep.subr.bf16.mxu0 0
  %800 = vmatpush1.bf16.msra.mxu0 0
  %801 = vmatprep.subr.bf16.mxu0 0
  %802 = vmatpush1.bf16.msra.mxu0 0
  %803 = vmatprep.subr.bf16.mxu0 0
  %804 = vmatpush1.bf16.msra.mxu0 0
  %805 = vmatprep.subr.bf16.mxu0 0
  %806 = vmatpush1.bf16.msra.mxu0 0
  %807 = vmatprep.subr.bf16.mxu0 0
  %808 = vmatpush1.bf16.msra.mxu0 0
  %809 = vmatprep.subr.bf16.mxu0 0
  %810 = vmatpush1.bf16.msra.mxu0 0
  %811 = vmatprep.subr.bf16.mxu0 0
  %812 = vmatpush1.bf16.msra.mxu0 0
  %813 = vmatprep.subr.bf16.mxu0 0
  %814 = vmatpush1.bf16.msra.mxu0 0
  %815 = vmatprep.subr.bf16.mxu0 0
  %816 = vmatpush1.bf16.msra.mxu0 0
  %817 = vmatprep.subr.bf16.mxu0 0
  %818 = vmatpush1.bf16.msra.mxu0 0
  %819 = vmatprep.mubr.bf16.mxu0 0
  %820 = vmatmul.mubr.bf16.gmra.mrb[0].mxu0 %v773
  %v821 = vpop.f32.mrb[0].mxu0
  %v822 = vadd.f32 0.0, %v821
  %v823 = vpop.f32.mrb[0].mxu0
  %v824 = vadd.f32 0.0, %v823
  %v825 = vpop.f32.mrb[0].mxu0
  %v826 = vpop.f32.mrb[0].mxu0
  %827 = vdwg.mxu0
  %828 = vmatprep.subr.bf16.mxu0 %v785
  %829 = vmatpush1.bf16.msra.mxu0 %v782
  %830 = vmatprep.subr.bf16.mxu0 0
  %831 = vmatpush1.bf16.msra.mxu0 0
  %832 = vmatprep.subr.bf16.mxu0 0
  %833 = vmatpush1.bf16.msra.mxu0 0
  %834 = vmatprep.subr.bf16.mxu0 0
  %835 = vmatpush1.bf16.msra.mxu0 0
  %836 = vmatprep.subr.bf16.mxu0 0
  %837 = vmatpush1.bf16.msra.mxu0 0
  %838 = vmatprep.subr.bf16.mxu0 0
  %839 = vmatpush1.bf16.msra.mxu0 0
  %840 = vmatprep.subr.bf16.mxu0 0
  %841 = vmatpush1.bf16.msra.mxu0 0
  %842 = vmatprep.subr.bf16.mxu0 0
  %843 = vmatpush1.bf16.msra.mxu0 0
  %844 = vmatprep.subr.bf16.mxu0 0
  %845 = vmatpush1.bf16.msra.mxu0 0
  %846 = vmatprep.subr.bf16.mxu0 0
  %847 = vmatpush1.bf16.msra.mxu0 0
  %848 = vmatprep.subr.bf16.mxu0 0
  %849 = vmatpush1.bf16.msra.mxu0 0
  %850 = vmatprep.subr.bf16.mxu0 0
  %851 = vmatpush1.bf16.msra.mxu0 0
  %852 = vmatprep.subr.bf16.mxu0 0
  %853 = vmatpush1.bf16.msra.mxu0 0
  %854 = vmatprep.subr.bf16.mxu0 0
  %855 = vmatpush1.bf16.msra.mxu0 0
  %856 = vmatprep.subr.bf16.mxu0 0
  %857 = vmatpush1.bf16.msra.mxu0 0
  %858 = vmatprep.subr.bf16.mxu0 0
  %859 = vmatpush1.bf16.msra.mxu0 0
  %860 = vmatprep.mubr.bf16.mxu0 0
  %861 = vmatmul.mubr.bf16.gmra.mrb[0].mxu0 %v773
  %v862 = vpop.f32.mrb[0].mxu0
  %v863 = vadd.f32 0.0, %v862
  %v864 = vpop.f32.mrb[0].mxu0
  %v865 = vadd.f32 0.0, %v864
  %v866 = vpop.f32.mrb[0].mxu0
  %v867 = vpop.f32.mrb[0].mxu0
  %868 = vdwg.mxu0
  %s869 = scalar_lea.vmem %s2, 5
  %v870 = vld [vmem:[%s869] ss:$8 sm:$0xf]
  %v872 = vlaneseq
  %v873 = vshrl.u32 %v872, 7
  %v874 = vsub.s32 0, %v873
  %v875 = vrot.slane %v870, %v874
  %v876 = vlaneseq
  %v877 = vshrl.u32 %v876, 7
  %v878 = vsub.s32 1, %v877
  %v879 = vrot.slane %v870, %v878
  %v880 = vlaneseq
  %v881 = vshrl.u32 %v880, 7
  %v882 = vsub.s32 2, %v881
  %v883 = vrot.slane %v870, %v882
  %v884 = vlaneseq
  %v885 = vshrl.u32 %v884, 7
  %v886 = vsub.s32 3, %v885
  %v887 = vrot.slane %v870, %v886
  %v892 = vmul.f32 %v822, %v875
  %v893 = vmul.f32 %v824, %v879
  %v894 = vmul.f32 %v863, %v883
  %v895 = vmul.f32 %v865, %v887
  %v896 = vadd.f32 %v749, %v892
  %v897 = vadd.f32 %v750, %v893
  %v898 = vadd.f32 %v751, %v894
  %v899 = vadd.f32 %v752, %v895
  %900 = vrot.lane.b32.xlu0 %v21, 113
  %v901 = vpop.permute.xlu0 %900
  %902 = vrot.lane.b32.xlu0 %v25, 113
  %v903 = vpop.permute.xlu0 %902
  %904 = vrot.lane.b32.xlu0 %v22, 113
  %v905 = vpop.permute.xlu0 %904
  %906 = vrot.lane.b32.xlu0 %v26, 113
  %v907 = vpop.permute.xlu0 %906
  %vm908 = vcmp.lt.s32.totalorder %v38, 113
  %v909 = vsel %vm908, %v905, %v907
  %v910 = vsel %vm908, %v903, %v905
  %v911 = vsel %vm908, %v901, %v903
  %v912 = vsel %vm908, %v907, %v901
  %s913 = scalar_lea.vmem %s1, 24
  %v914 = vld [vmem:[%s913] sm:$0xf]
  %v915 = vpack.c.bf16 %v911, %v911
  %v916 = vpack.c.bf16 %v910, %v910
  %v917 = vpack.c.bf16 %v909, %v909
  %v918 = vpack.c.bf16 %v912, %v912
  %v920 = vsel %vm49, %v914, 0
  %v923 = vsel %vm53, %v915, 0
  %v926 = vsel %vm53, %v916, 0
  %v929 = vsel %vm53, %v917, 0
  %v932 = vsel %vm53, %v918, 0
  %934 = vmatprep.subr.bf16.mxu0 %v926
  %935 = vmatpush1.bf16.msra.mxu0 %v923
  %936 = vmatprep.subr.bf16.mxu0 0
  %937 = vmatpush1.bf16.msra.mxu0 0
  %938 = vmatprep.subr.bf16.mxu0 0
  %939 = vmatpush1.bf16.msra.mxu0 0
  %940 = vmatprep.subr.bf16.mxu0 0
  %941 = vmatpush1.bf16.msra.mxu0 0
  %942 = vmatprep.subr.bf16.mxu0 0
  %943 = vmatpush1.bf16.msra.mxu0 0
  %944 = vmatprep.subr.bf16.mxu0 0
  %945 = vmatpush1.bf16.msra.mxu0 0
  %946 = vmatprep.subr.bf16.mxu0 0
  %947 = vmatpush1.bf16.msra.mxu0 0
  %948 = vmatprep.subr.bf16.mxu0 0
  %949 = vmatpush1.bf16.msra.mxu0 0
  %950 = vmatprep.subr.bf16.mxu0 0
  %951 = vmatpush1.bf16.msra.mxu0 0
  %952 = vmatprep.subr.bf16.mxu0 0
  %953 = vmatpush1.bf16.msra.mxu0 0
  %954 = vmatprep.subr.bf16.mxu0 0
  %955 = vmatpush1.bf16.msra.mxu0 0
  %956 = vmatprep.subr.bf16.mxu0 0
  %957 = vmatpush1.bf16.msra.mxu0 0
  %958 = vmatprep.subr.bf16.mxu0 0
  %959 = vmatpush1.bf16.msra.mxu0 0
  %960 = vmatprep.subr.bf16.mxu0 0
  %961 = vmatpush1.bf16.msra.mxu0 0
  %962 = vmatprep.subr.bf16.mxu0 0
  %963 = vmatpush1.bf16.msra.mxu0 0
  %964 = vmatprep.subr.bf16.mxu0 0
  %965 = vmatpush1.bf16.msra.mxu0 0
  %966 = vmatprep.mubr.bf16.mxu0 0
  %967 = vmatmul.mubr.bf16.gmra.mrb[0].mxu0 %v920
  %v968 = vpop.f32.mrb[0].mxu0
  %v969 = vadd.f32 0.0, %v968
  %v970 = vpop.f32.mrb[0].mxu0
  %v971 = vadd.f32 0.0, %v970
  %v972 = vpop.f32.mrb[0].mxu0
  %v973 = vpop.f32.mrb[0].mxu0
  %974 = vdwg.mxu0
  %975 = vmatprep.subr.bf16.mxu0 %v932
  %976 = vmatpush1.bf16.msra.mxu0 %v929
  %977 = vmatprep.subr.bf16.mxu0 0
  %978 = vmatpush1.bf16.msra.mxu0 0
  %979 = vmatprep.subr.bf16.mxu0 0
  %980 = vmatpush1.bf16.msra.mxu0 0
  %981 = vmatprep.subr.bf16.mxu0 0
  %982 = vmatpush1.bf16.msra.mxu0 0
  %983 = vmatprep.subr.bf16.mxu0 0
  %984 = vmatpush1.bf16.msra.mxu0 0
  %985 = vmatprep.subr.bf16.mxu0 0
  %986 = vmatpush1.bf16.msra.mxu0 0
  %987 = vmatprep.subr.bf16.mxu0 0
  %988 = vmatpush1.bf16.msra.mxu0 0
  %989 = vmatprep.subr.bf16.mxu0 0
  %990 = vmatpush1.bf16.msra.mxu0 0
  %991 = vmatprep.subr.bf16.mxu0 0
  %992 = vmatpush1.bf16.msra.mxu0 0
  %993 = vmatprep.subr.bf16.mxu0 0
  %994 = vmatpush1.bf16.msra.mxu0 0
  %995 = vmatprep.subr.bf16.mxu0 0
  %996 = vmatpush1.bf16.msra.mxu0 0
  %997 = vmatprep.subr.bf16.mxu0 0
  %998 = vmatpush1.bf16.msra.mxu0 0
  %999 = vmatprep.subr.bf16.mxu0 0
  %1000 = vmatpush1.bf16.msra.mxu0 0
  %1001 = vmatprep.subr.bf16.mxu0 0
  %1002 = vmatpush1.bf16.msra.mxu0 0
  %1003 = vmatprep.subr.bf16.mxu0 0
  %1004 = vmatpush1.bf16.msra.mxu0 0
  %1005 = vmatprep.subr.bf16.mxu0 0
  %1006 = vmatpush1.bf16.msra.mxu0 0
  %1007 = vmatprep.mubr.bf16.mxu0 0
  %1008 = vmatmul.mubr.bf16.gmra.mrb[0].mxu0 %v920
  %v1009 = vpop.f32.mrb[0].mxu0
  %v1010 = vadd.f32 0.0, %v1009
  %v1011 = vpop.f32.mrb[0].mxu0
  %v1012 = vadd.f32 0.0, %v1011
  %v1013 = vpop.f32.mrb[0].mxu0
  %v1014 = vpop.f32.mrb[0].mxu0
  %1015 = vdwg.mxu0
  %s1016 = scalar_lea.vmem %s2, 6
  %v1017 = vld [vmem:[%s1016] ss:$8 sm:$0xf]
  %v1019 = vlaneseq
  %v1020 = vshrl.u32 %v1019, 7
  %v1021 = vsub.s32 0, %v1020
  %v1022 = vrot.slane %v1017, %v1021
  %v1023 = vlaneseq
  %v1024 = vshrl.u32 %v1023, 7
  %v1025 = vsub.s32 1, %v1024
  %v1026 = vrot.slane %v1017, %v1025
  %v1027 = vlaneseq
  %v1028 = vshrl.u32 %v1027, 7
  %v1029 = vsub.s32 2, %v1028
  %v1030 = vrot.slane %v1017, %v1029
  %v1031 = vlaneseq
  %v1032 = vshrl.u32 %v1031, 7
  %v1033 = vsub.s32 3, %v1032
  %v1034 = vrot.slane %v1017, %v1033
  %v1039 = vmul.f32 %v969, %v1022
  %v1040 = vmul.f32 %v971, %v1026
  %v1041 = vmul.f32 %v1010, %v1030
  %v1042 = vmul.f32 %v1012, %v1034
  %v1043 = vadd.f32 %v896, %v1039
  %v1044 = vadd.f32 %v897, %v1040
  %v1045 = vadd.f32 %v898, %v1041
  %v1046 = vadd.f32 %v899, %v1042
  %1047 = vrot.lane.b32.xlu0 %v21, 112
  %v1048 = vpop.permute.xlu0 %1047
  %1049 = vrot.lane.b32.xlu0 %v25, 112
  %v1050 = vpop.permute.xlu0 %1049
  %1051 = vrot.lane.b32.xlu0 %v22, 112
  %v1052 = vpop.permute.xlu0 %1051
  %1053 = vrot.lane.b32.xlu0 %v26, 112
  %v1054 = vpop.permute.xlu0 %1053
  %vm1055 = vcmp.lt.s32.totalorder %v38, 112
  %v1056 = vsel %vm1055, %v1052, %v1054
  %v1057 = vsel %vm1055, %v1050, %v1052
  %v1058 = vsel %vm1055, %v1048, %v1050
  %v1059 = vsel %vm1055, %v1054, %v1048
  %s1060 = scalar_lea.vmem %s1, 28
  %v1061 = vld [vmem:[%s1060] sm:$0xf]
  %v1062 = vpack.c.bf16 %v1058, %v1058
  %v1063 = vpack.c.bf16 %v1057, %v1057
  %v1064 = vpack.c.bf16 %v1056, %v1056
  %v1065 = vpack.c.bf16 %v1059, %v1059
  %v1067 = vsel %vm49, %v1061, 0
  %v1070 = vsel %vm53, %v1062, 0
  %v1073 = vsel %vm53, %v1063, 0
  %v1076 = vsel %vm53, %v1064, 0
  %v1079 = vsel %vm53, %v1065, 0
  %1081 = vmatprep.subr.bf16.mxu0 %v1073
  %1082 = vmatpush1.bf16.msra.mxu0 %v1070
  %1083 = vmatprep.subr.bf16.mxu0 0
  %1084 = vmatpush1.bf16.msra.mxu0 0
  %1085 = vmatprep.subr.bf16.mxu0 0
  %1086 = vmatpush1.bf16.msra.mxu0 0
  %1087 = vmatprep.subr.bf16.mxu0 0
  %1088 = vmatpush1.bf16.msra.mxu0 0
  %1089 = vmatprep.subr.bf16.mxu0 0
  %1090 = vmatpush1.bf16.msra.mxu0 0
  %1091 = vmatprep.subr.bf16.mxu0 0
  %1092 = vmatpush1.bf16.msra.mxu0 0
  %1093 = vmatprep.subr.bf16.mxu0 0
  %1094 = vmatpush1.bf16.msra.mxu0 0
  %1095 = vmatprep.subr.bf16.mxu0 0
  %1096 = vmatpush1.bf16.msra.mxu0 0
  %1097 = vmatprep.subr.bf16.mxu0 0
  %1098 = vmatpush1.bf16.msra.mxu0 0
  %1099 = vmatprep.subr.bf16.mxu0 0
  %1100 = vmatpush1.bf16.msra.mxu0 0
  %1101 = vmatprep.subr.bf16.mxu0 0
  %1102 = vmatpush1.bf16.msra.mxu0 0
  %1103 = vmatprep.subr.bf16.mxu0 0
  %1104 = vmatpush1.bf16.msra.mxu0 0
  %1105 = vmatprep.subr.bf16.mxu0 0
  %1106 = vmatpush1.bf16.msra.mxu0 0
  %1107 = vmatprep.subr.bf16.mxu0 0
  %1108 = vmatpush1.bf16.msra.mxu0 0
  %1109 = vmatprep.subr.bf16.mxu0 0
  %1110 = vmatpush1.bf16.msra.mxu0 0
  %1111 = vmatprep.subr.bf16.mxu0 0
  %1112 = vmatpush1.bf16.msra.mxu0 0
  %1113 = vmatprep.mubr.bf16.mxu0 0
  %1114 = vmatmul.mubr.bf16.gmra.mrb[0].mxu0 %v1067
  %v1115 = vpop.f32.mrb[0].mxu0
  %v1116 = vadd.f32 0.0, %v1115
  %v1117 = vpop.f32.mrb[0].mxu0
  %v1118 = vadd.f32 0.0, %v1117
  %v1119 = vpop.f32.mrb[0].mxu0
  %v1120 = vpop.f32.mrb[0].mxu0
  %1121 = vdwg.mxu0
  %1122 = vmatprep.subr.bf16.mxu0 %v1079
  %1123 = vmatpush1.bf16.msra.mxu0 %v1076
  %1124 = vmatprep.subr.bf16.mxu0 0
  %1125 = vmatpush1.bf16.msra.mxu0 0
  %1126 = vmatprep.subr.bf16.mxu0 0
  %1127 = vmatpush1.bf16.msra.mxu0 0
  %1128 = vmatprep.subr.bf16.mxu0 0
  %1129 = vmatpush1.bf16.msra.mxu0 0
  %1130 = vmatprep.subr.bf16.mxu0 0
  %1131 = vmatpush1.bf16.msra.mxu0 0
  %1132 = vmatprep.subr.bf16.mxu0 0
  %1133 = vmatpush1.bf16.msra.mxu0 0
  %1134 = vmatprep.subr.bf16.mxu0 0
  %1135 = vmatpush1.bf16.msra.mxu0 0
  %1136 = vmatprep.subr.bf16.mxu0 0
  %1137 = vmatpush1.bf16.msra.mxu0 0
  %1138 = vmatprep.subr.bf16.mxu0 0
  %1139 = vmatpush1.bf16.msra.mxu0 0
  %1140 = vmatprep.subr.bf16.mxu0 0
  %1141 = vmatpush1.bf16.msra.mxu0 0
  %1142 = vmatprep.subr.bf16.mxu0 0
  %1143 = vmatpush1.bf16.msra.mxu0 0
  %1144 = vmatprep.subr.bf16.mxu0 0
  %1145 = vmatpush1.bf16.msra.mxu0 0
  %1146 = vmatprep.subr.bf16.mxu0 0
  %1147 = vmatpush1.bf16.msra.mxu0 0
  %1148 = vmatprep.subr.bf16.mxu0 0
  %1149 = vmatpush1.bf16.msra.mxu0 0
  %1150 = vmatprep.subr.bf16.mxu0 0
  %1151 = vmatpush1.bf16.msra.mxu0 0
  %1152 = vmatprep.subr.bf16.mxu0 0
  %1153 = vmatpush1.bf16.msra.mxu0 0
  %1154 = vmatprep.mubr.bf16.mxu0 0
  %1155 = vmatmul.mubr.bf16.gmra.mrb[0].mxu0 %v1067
  %v1156 = vpop.f32.mrb[0].mxu0
  %v1157 = vadd.f32 0.0, %v1156
  %v1158 = vpop.f32.mrb[0].mxu0
  %v1159 = vadd.f32 0.0, %v1158
  %v1160 = vpop.f32.mrb[0].mxu0
  %v1161 = vpop.f32.mrb[0].mxu0
  %1162 = vdwg.mxu0
  %s1163 = scalar_lea.vmem %s2, 7
  %v1164 = vld [vmem:[%s1163] ss:$8 sm:$0xf]
  %v1166 = vlaneseq
  %v1167 = vshrl.u32 %v1166, 7
  %v1168 = vsub.s32 0, %v1167
  %v1169 = vrot.slane %v1164, %v1168
  %v1170 = vlaneseq
  %v1171 = vshrl.u32 %v1170, 7
  %v1172 = vsub.s32 1, %v1171
  %v1173 = vrot.slane %v1164, %v1172
  %v1174 = vlaneseq
  %v1175 = vshrl.u32 %v1174, 7
  %v1176 = vsub.s32 2, %v1175
  %v1177 = vrot.slane %v1164, %v1176
  %v1178 = vlaneseq
  %v1179 = vshrl.u32 %v1178, 7
  %v1180 = vsub.s32 3, %v1179
  %v1181 = vrot.slane %v1164, %v1180
  %v1186 = vmul.f32 %v1116, %v1169
  %v1187 = vmul.f32 %v1118, %v1173
  %v1188 = vmul.f32 %v1157, %v1177
  %v1189 = vmul.f32 %v1159, %v1181
  %v1190 = vadd.f32 %v1043, %v1186
  %v1191 = vadd.f32 %v1044, %v1187
  %v1192 = vadd.f32 %v1045, %v1188
  %v1193 = vadd.f32 %v1046, %v1189
  %1194 = vrot.lane.b32.xlu0 %v21, 111
  %v1195 = vpop.permute.xlu0 %1194
  %1196 = vrot.lane.b32.xlu0 %v25, 111
  %v1197 = vpop.permute.xlu0 %1196
  %1198 = vrot.lane.b32.xlu0 %v22, 111
  %v1199 = vpop.permute.xlu0 %1198
  %1200 = vrot.lane.b32.xlu0 %v26, 111
  %v1201 = vpop.permute.xlu0 %1200
  %vm1202 = vcmp.lt.s32.totalorder %v38, 111
  %v1203 = vsel %vm1202, %v1199, %v1201
  %v1204 = vsel %vm1202, %v1197, %v1199
  %v1205 = vsel %vm1202, %v1195, %v1197
  %v1206 = vsel %vm1202, %v1201, %v1195
  %s1207 = scalar_lea.vmem %s1, 32
  %v1208 = vld [vmem:[%s1207] sm:$0xf]
  %v1209 = vpack.c.bf16 %v1205, %v1205
  %v1210 = vpack.c.bf16 %v1204, %v1204
  %v1211 = vpack.c.bf16 %v1203, %v1203
  %v1212 = vpack.c.bf16 %v1206, %v1206
  %v1214 = vsel %vm49, %v1208, 0
  %v1217 = vsel %vm53, %v1209, 0
  %v1220 = vsel %vm53, %v1210, 0
  %v1223 = vsel %vm53, %v1211, 0
  %v1226 = vsel %vm53, %v1212, 0
  %1228 = vmatprep.subr.bf16.mxu0 %v1220
  %1229 = vmatpush1.bf16.msra.mxu0 %v1217
  %1230 = vmatprep.subr.bf16.mxu0 0
  %1231 = vmatpush1.bf16.msra.mxu0 0
  %1232 = vmatprep.subr.bf16.mxu0 0
  %1233 = vmatpush1.bf16.msra.mxu0 0
  %1234 = vmatprep.subr.bf16.mxu0 0
  %1235 = vmatpush1.bf16.msra.mxu0 0
  %1236 = vmatprep.subr.bf16.mxu0 0
  %1237 = vmatpush1.bf16.msra.mxu0 0
  %1238 = vmatprep.subr.bf16.mxu0 0
  %1239 = vmatpush1.bf16.msra.mxu0 0
  %1240 = vmatprep.subr.bf16.mxu0 0
  %1241 = vmatpush1.bf16.msra.mxu0 0
  %1242 = vmatprep.subr.bf16.mxu0 0
  %1243 = vmatpush1.bf16.msra.mxu0 0
  %1244 = vmatprep.subr.bf16.mxu0 0
  %1245 = vmatpush1.bf16.msra.mxu0 0
  %1246 = vmatprep.subr.bf16.mxu0 0
  %1247 = vmatpush1.bf16.msra.mxu0 0
  %1248 = vmatprep.subr.bf16.mxu0 0
  %1249 = vmatpush1.bf16.msra.mxu0 0
  %1250 = vmatprep.subr.bf16.mxu0 0
  %1251 = vmatpush1.bf16.msra.mxu0 0
  %1252 = vmatprep.subr.bf16.mxu0 0
  %1253 = vmatpush1.bf16.msra.mxu0 0
  %1254 = vmatprep.subr.bf16.mxu0 0
  %1255 = vmatpush1.bf16.msra.mxu0 0
  %1256 = vmatprep.subr.bf16.mxu0 0
  %1257 = vmatpush1.bf16.msra.mxu0 0
  %1258 = vmatprep.subr.bf16.mxu0 0
  %1259 = vmatpush1.bf16.msra.mxu0 0
  %1260 = vmatprep.mubr.bf16.mxu0 0
  %1261 = vmatmul.mubr.bf16.gmra.mrb[0].mxu0 %v1214
  %v1262 = vpop.f32.mrb[0].mxu0
  %v1263 = vadd.f32 0.0, %v1262
  %v1264 = vpop.f32.mrb[0].mxu0
  %v1265 = vadd.f32 0.0, %v1264
  %v1266 = vpop.f32.mrb[0].mxu0
  %v1267 = vpop.f32.mrb[0].mxu0
  %1268 = vdwg.mxu0
  %1269 = vmatprep.subr.bf16.mxu0 %v1226
  %1270 = vmatpush1.bf16.msra.mxu0 %v1223
  %1271 = vmatprep.subr.bf16.mxu0 0
  %1272 = vmatpush1.bf16.msra.mxu0 0
  %1273 = vmatprep.subr.bf16.mxu0 0
  %1274 = vmatpush1.bf16.msra.mxu0 0
  %1275 = vmatprep.subr.bf16.mxu0 0
  %1276 = vmatpush1.bf16.msra.mxu0 0
  %1277 = vmatprep.subr.bf16.mxu0 0
  %1278 = vmatpush1.bf16.msra.mxu0 0
  %1279 = vmatprep.subr.bf16.mxu0 0
  %1280 = vmatpush1.bf16.msra.mxu0 0
  %1281 = vmatprep.subr.bf16.mxu0 0
  %1282 = vmatpush1.bf16.msra.mxu0 0
  %1283 = vmatprep.subr.bf16.mxu0 0
  %1284 = vmatpush1.bf16.msra.mxu0 0
  %1285 = vmatprep.subr.bf16.mxu0 0
  %1286 = vmatpush1.bf16.msra.mxu0 0
  %1287 = vmatprep.subr.bf16.mxu0 0
  %1288 = vmatpush1.bf16.msra.mxu0 0
  %1289 = vmatprep.subr.bf16.mxu0 0
  %1290 = vmatpush1.bf16.msra.mxu0 0
  %1291 = vmatprep.subr.bf16.mxu0 0
  %1292 = vmatpush1.bf16.msra.mxu0 0
  %1293 = vmatprep.subr.bf16.mxu0 0
  %1294 = vmatpush1.bf16.msra.mxu0 0
  %1295 = vmatprep.subr.bf16.mxu0 0
  %1296 = vmatpush1.bf16.msra.mxu0 0
  %1297 = vmatprep.subr.bf16.mxu0 0
  %1298 = vmatpush1.bf16.msra.mxu0 0
  %1299 = vmatprep.subr.bf16.mxu0 0
  %1300 = vmatpush1.bf16.msra.mxu0 0
  %1301 = vmatprep.mubr.bf16.mxu0 0
  %1302 = vmatmul.mubr.bf16.gmra.mrb[0].mxu0 %v1214
  %v1303 = vpop.f32.mrb[0].mxu0
  %v1304 = vadd.f32 0.0, %v1303
  %v1305 = vpop.f32.mrb[0].mxu0
  %v1306 = vadd.f32 0.0, %v1305
  %v1307 = vpop.f32.mrb[0].mxu0
  %v1308 = vpop.f32.mrb[0].mxu0
  %1309 = vdwg.mxu0
  %s1310 = scalar_lea.vmem %s2, 32
  %v1311 = vld [vmem:[%s1310] ss:$8 sm:$0xf]
  %v1313 = vlaneseq
  %v1314 = vshrl.u32 %v1313, 7
  %v1315 = vsub.s32 0, %v1314
  %v1316 = vrot.slane %v1311, %v1315
  %v1317 = vlaneseq
  %v1318 = vshrl.u32 %v1317, 7
  %v1319 = vsub.s32 1, %v1318
  %v1320 = vrot.slane %v1311, %v1319
  %v1321 = vlaneseq
  %v1322 = vshrl.u32 %v1321, 7
  %v1323 = vsub.s32 2, %v1322
  %v1324 = vrot.slane %v1311, %v1323
  %v1325 = vlaneseq
  %v1326 = vshrl.u32 %v1325, 7
  %v1327 = vsub.s32 3, %v1326
  %v1328 = vrot.slane %v1311, %v1327
  %v1333 = vmul.f32 %v1263, %v1316
  %v1334 = vmul.f32 %v1265, %v1320
  %v1335 = vmul.f32 %v1304, %v1324
  %v1336 = vmul.f32 %v1306, %v1328
  %v1337 = vadd.f32 %v1190, %v1333
  %v1338 = vadd.f32 %v1191, %v1334
  %v1339 = vadd.f32 %v1192, %v1335
  %v1340 = vadd.f32 %v1193, %v1336
  %v1341 = vadd.f32 %v1337, %v1338
  %v1342 = vadd.f32 %v1341, %v1339
  %v1343 = vadd.f32 %v1342, %v1340
  %1344 = vadd.xlane.f32.xlu0 %v1343
  %v1345 = vpop.xlane.xlu0 %1344
  %v1346 = vmul.f32 %v1345, 0.001953125
  %v1347 = vsub.f32 %v1337, %v1346
  %v1348 = vsub.f32 %v1338, %v1346
  %v1349 = vsub.f32 %v1339, %v1346
  %v1350 = vsub.f32 %v1340, %v1346
  %v1351 = vmul.f32 %v1347, %v1347
  %v1352 = vmul.f32 %v1348, %v1348
  %v1353 = vmul.f32 %v1349, %v1349
  %v1354 = vmul.f32 %v1350, %v1350
  %v1355 = vadd.f32 %v1351, %v1352
  %v1356 = vadd.f32 %v1355, %v1353
  %v1357 = vadd.f32 %v1356, %v1354
  %1358 = vadd.xlane.f32.xlu0 %v1357
  %v1359 = vpop.xlane.xlu0 %1358
  %v1360 = vmul.f32 %v1359, 0.001953125
  %v1361 = vadd.f32 %v1360, 1e-05
  %v1362 = vrsqrt.pop %v1361
  %v1363 = vld [vmem:[%s3] sm:$0xff]
  %v1364 = vmul.f32 %v1363, %v1362
  %1366 = vset.pattern.permute.xlu0 0
  %1367 = vperm.xlu0 %1366, %v1364
  %v1368 = vpop.permute.xlu0 %1367
  %v1370 = vmul.f32 %v1347, %v1368
  %v1371 = vmul.f32 %v1348, %v1368
  %v1372 = vmul.f32 %v1349, %v1368
  %v1373 = vmul.f32 %v1350, %v1368
  %v1374 = vld [vmem:[%s4] sm:$0xff]
  %1376 = vset.pattern.permute.xlu0 0
  %1377 = vperm.xlu0 %1376, %v1374
  %v1378 = vpop.permute.xlu0 %1377
  %v1380 = vadd.f32 %v1370, %v1378
  %v1381 = vadd.f32 %v1371, %v1378
  %v1382 = vadd.f32 %v1372, %v1378
  %v1383 = vadd.f32 %v1373, %v1378
  %1384 = vst [vmem:[%s5] sm:$0xff] %v1380
  %1385 = vst [vmem:[%s5 + $0x8] sm:$0xff] %v1381
  %1386 = vst [vmem:[%s5 + $0x10] sm:$0xff] %v1382
  %1387 = vst [vmem:[%s5 + $0x18] sm:$0xff] %v1383
  // Predicated region
  $region22: #{sparse_latent_adapter.1} parent=0 // pred_check
    _
  $region23: #{sparse_latent_adapter.1} parent=0 // pred_check_branch
    %1389 = sbr.rel (0) target = $region25
  $region24: #{sparse_latent_adapter.1} parent=0 // pred_region
    _
  $region25: #{sparse_latent_adapter.1} parent=0 // pred_fallthru
    _
  // Predicated region
  $region26: #{sparse_latent_adapter.1} parent=0 // pred_check
    _
  $region27: #{sparse_latent_adapter.1} parent=0 // pred_check_branch
    %1391 = sbr.rel (0) target = $region29
  $region28: #{sparse_latent_adapter.1} parent=0 // pred_region
    _
  $region29: #{sparse_latent_adapter.1} parent=0 // pred_fallthru
    _

</llo_original>
